<compile_context>
chip_gen: v6e
topology: v6e:2x2x1
jax: 0.10.0
libtpu: 0.0.40
codegen_flags: <defaults>
</compile_context>

<pallas_src>
import functools

import jax
import jax.numpy as jnp
from jax.experimental import pallas as pl
from jax.experimental.pallas import tpu as pltpu


# ------------------------------- tiling knobs -------------------------------
_SMALL_FASTPATH_ELEMS = 1 << 17   # ~0.5 MiB f32: below this, fused XLA wins
_MAX_LANE_TILE = 4096             # lane cap for PReLU blocks (multiple of 128)


def _tile_budget():
    """Per-chip (block_bytes, vmem_limit_bytes) derived from physical VMEM.

    128-MiB chips (v5e/v6e): 8-MiB blocks, scoped limit raised to 48 MiB
    (in + out double-buffered = 32 MiB resident).
    64-MiB chips (v7x): 4-MiB blocks, 24-MiB scoped limit (16 MiB resident).
    """
    try:
        vmem = pltpu.get_tpu_info().vmem_capacity_bytes
    except Exception:
        vmem = 128 << 20
    block_bytes = int(min(8 << 20, max(1 << 20, vmem // 16)))
    vmem_limit = int(min(vmem // 2, 6 * block_bytes))
    return block_bytes, vmem_limit


def _pick_lane_width(total):
    """Largest power-of-two multiple of 128 that divides `total` (or None)."""
    for lane in (4096, 2048, 1024, 512, 256, 128):
        if total % lane == 0:
            return lane
    return None


def _pick_tm(rows, lane, itemsize, block_bytes):
    """Row-tile size: ~block_bytes per block, multiple of 32, or full rows."""
    tm = max(32, (block_bytes // (lane * itemsize)) // 32 * 32)
    return rows if rows <= tm else tm


# -------------------------------- kernel math --------------------------------
def _apply_act(x, act_type):
    """Elementwise activation; `act_type` is a static Python string."""
    if act_type == "relu":
        return jnp.maximum(x, jnp.zeros_like(x))
    if act_type == "swish":
        xf = x.astype(jnp.float32)
        return (xf * jax.nn.sigmoid(xf)).astype(x.dtype)
    if act_type == "hardswish":
        # Matches the reference HardSwish: x * clamp((x + 1) / 2, 0, 1)
        xf = x.astype(jnp.float32)
        return (xf * jnp.clip((xf + 1.0) * 0.5, 0.0, 1.0)).astype(x.dtype)
    if act_type == "mish":
        # x * tanh(softplus(x)).  With e = exp(x):
        #   tanh(log(1+e)) = (e^2 + 2e) / (e^2 + 2e + 2)
        # -> one EUP transcendental per element instead of exp+log+tanh.
        xf = x.astype(jnp.float32)
        e = jnp.exp(jnp.minimum(xf, 20.0))   # for x > 20, mish(x) == x in f32
        num = e * e + 2.0 * e
        return (xf * (num / (num + 2.0))).astype(x.dtype)
    return x  # identity (self.act is None)


def _ew_kernel(x_ref, o_ref, *, act_type):
    o_ref[...] = _apply_act(x_ref[...], act_type)


def _prelu_kernel(x_ref, w_ref, o_ref):
    x = x_ref[...]
    w = w_ref[...]                              # (tm, 1) -> broadcast over lanes
    o_ref[...] = jnp.where(x >= 0, x, w * x)


# ------------------------------- pallas calls --------------------------------
@functools.partial(jax.jit, static_argnames=("act_type", "tm", "vmem_limit"))
def _act_slab(x2, act_type, tm, vmem_limit):
    rows, lanes = x2.shape
    nbytes = x2.size * jnp.dtype(x2.dtype).itemsize
    transc = x2.size if act_type in ("swish", "mish") else 0
    return pl.pallas_call(
        functools.partial(_ew_kernel, act_type=act_type),
        out_shape=jax.ShapeDtypeStruct(x2.shape, x2.dtype),
        grid=(pl.cdiv(rows, tm),),
        in_specs=[pl.BlockSpec((tm, lanes), lambda i: (i, 0))],
        out_specs=pl.BlockSpec((tm, lanes), lambda i: (i, 0)),
        compiler_params=pltpu.CompilerParams(
            dimension_semantics=("parallel",),
            vmem_limit_bytes=vmem_limit),
        cost_estimate=pl.CostEstimate(
            flops=4 * x2.size, transcendentals=transc,
            bytes_accessed=2 * nbytes),
    )(x2)


@functools.partial(jax.jit, static_argnames=("tm", "tn", "vmem_limit"))
def _prelu_2d(x2, w2, tm, tn, vmem_limit):
    rows, cols = x2.shape
    nbytes = x2.size * jnp.dtype(x2.dtype).itemsize
    return pl.pallas_call(
        _prelu_kernel,
        out_shape=jax.ShapeDtypeStruct(x2.shape, x2.dtype),
        grid=(pl.cdiv(rows, tm), pl.cdiv(cols, tn)),
        in_specs=[
            pl.BlockSpec((tm, tn), lambda i, j: (i, j)),
            pl.BlockSpec((tm, 1), lambda i, j: (i, 0)),
        ],
        out_specs=pl.BlockSpec((tm, tn), lambda i, j: (i, j)),
        compiler_params=pltpu.CompilerParams(
            dimension_semantics=("parallel", "parallel"),
            vmem_limit_bytes=vmem_limit),
        cost_estimate=pl.CostEstimate(
            flops=2 * x2.size, transcendentals=0,
            bytes_accessed=2 * nbytes),
    )(x2, w2)


# ---------------------------------- wrapper ----------------------------------
def act_forward(x, act_type="relu", prelu_weight=None, force_pallas=False):
    """Forward pass of `Act` for an NCHW input `x`.

    prelu_weight: shape (C,) per-channel slope (only used for act_type='prelu').
    force_pallas: bypass the small-tensor fast path (used by the self-test).
    """
    if act_type == "prelu":
        n, c, h, w = x.shape
        if prelu_weight is None:
            prelu_weight = jnp.full((c,), 0.25, dtype=x.dtype)  # nn.PReLU default
        nc, hw = n * c, h * w

        use_pallas = (hw % 128 == 0 and hw >= 256 and
                      (force_pallas or x.size >= _SMALL_FASTPATH_ELEMS))
        if not use_pallas:
            # Small / lane-misaligned spatial maps: padding would inflate HBM
            # traffic ~2x, and XLA's fused where() is already roofline-bound.
            wb = prelu_weight.astype(x.dtype).reshape(1, c, 1, 1)
            return jnp.where(x >= 0, x, wb * x)

        itemsize = jnp.dtype(x.dtype).itemsize
        block_bytes, vmem_limit = _tile_budget()
        x2 = x.reshape(nc, hw)                               # zero-copy view
        w2 = jnp.tile(prelu_weight.astype(x.dtype), n).reshape(nc, 1)
        tn = min(hw, _MAX_LANE_TILE)                         # multiple of 128
        tm = _pick_tm(nc, tn, itemsize, block_bytes)
        out2 = _prelu_2d(x2, w2, tm, tn, vmem_limit)
        return out2.reshape(n, c, h, w)

    if act_type in ("relu", "swish", "hardswish", "mish"):
        total = x.size
        if not force_pallas and total < _SMALL_FASTPATH_ELEMS:
            return _apply_act(x, act_type)       # launch overhead dominates

        lane = _pick_lane_width(total)
        if lane is None:
            # total not a multiple of 128: plain XLA already does exactly
            # one HBM read + one write; pad+kernel+slice would triple that.
            return _apply_act(x, act_type)

        itemsize = jnp.dtype(x.dtype).itemsize
        block_bytes, vmem_limit = _tile_budget()
        rows = total // lane
        tm = _pick_tm(rows, lane, itemsize, block_bytes)
        x2 = x.reshape(rows, lane)                           # zero-copy view
        out2 = _act_slab(x2, act_type, tm, vmem_limit)
        return out2.reshape(x.shape)

    # act_type not recognized -> self.act is None -> identity
    return x


# --------------------------------- reference ---------------------------------
def _reference(x, act_type, prelu_weight):
    if act_type == "relu":
        return jnp.maximum(x, 0.0)
    if act_type == "prelu":
        w = prelu_weight.reshape(1, -1, 1, 1)
        return jnp.where(x >= 0, x, w * x)
    if act_type == "swish":
        return x * jax.nn.sigmoid(x)
    if act_type == "hardswish":
        return x * jnp.clip((x + 1.0) * 0.5, 0.0, 1.0)
    if act_type == "mish":
        return x * jnp.tanh(jax.nn.softplus(x))
    return x


if __name__ == "__main__":
    key = jax.random.PRNGKey(0)
    n, c, h, w = 2, 4, 16, 16
    x = jax.random.normal(key, (n, c, h, w), dtype=jnp.float32)

    # Deterministic PReLU parameter (shape (out_planes,) = (C,)), as in __init__.
    prelu_weight = jnp.linspace(0.1, 0.4, c, dtype=jnp.float32)

    ok = True

    # 1) Module-sized inputs; force the Pallas path so the kernels are run.
    for act_type in ["relu", "prelu", "swish", "hardswish", "mish", "none"]:
        y = jax.block_until_ready(
            act_forward(x, act_type=act_type, prelu_weight=prelu_weight,
                        force_pallas=True))
        y_ref = _reference(x, act_type, prelu_weight)
        if not jnp.allclose(y, y_ref, atol=1e-5, rtol=1e-5):
            ok = False
            print(f"MISMATCH for act_type={act_type} (small)")

    # 2) Larger input: exercises multi-block grids and partial edge blocks on
    #    the natural (non-forced) Pallas path.
    nb, cb, hb, wb_sp = 4, 32, 160, 160
    xb = jax.random.normal(jax.random.PRNGKey(1), (nb, cb, hb, wb_sp),
                           dtype=jnp.float32)
    wb_prelu = jnp.linspace(0.05, 0.5, cb, dtype=jnp.float32)
    for act_type in ["relu", "prelu"]:
        y = jax.block_until_ready(
            act_forward(xb, act_type=act_type, prelu_weight=wb_prelu))
        y_ref = _reference(xb, act_type, wb_prelu)
        if not jnp.allclose(y, y_ref, atol=1e-5, rtol=1e-5):
            ok = False
            print(f"MISMATCH for act_type={act_type} (large)")

    if ok:
        print("KERNEL_OK")
</pallas_src>

<mosaic_0001>
module attributes {stable_mosaic.version = 11 : i64} {
  func.func @_ew_kernel(%arg0: i32, %arg1: memref<1x2048xf32, #tpu.memory_space<vmem>>, %arg2: memref<1x2048xf32, #tpu.memory_space<vmem>>) attributes {dimension_semantics = [#tpu.dimension_semantics<parallel>], iteration_bounds = array<i64: 1>, scalar_prefetch = 0 : i64, scratch_operands = 0 : i64, tpu.core_type = #tpu.core_type<tc>, window_params = [{transform_indices = @transform_0, window_bounds = array<i64: 1, 2048>}, {transform_indices = @transform_1, window_bounds = array<i64: 1, 2048>}]} {
    %c0 = arith.constant 0 : index
    %c0_0 = arith.constant 0 : index
    %0 = vector.load %arg1[%c0, %c0_0] : memref<1x2048xf32, #tpu.memory_space<vmem>>, vector<1x2048xf32>
    %cst = arith.constant 0.000000e+00 : f32
    %1 = vector.broadcast %cst : f32 to vector<1x2048xf32>
    %2 = arith.maximumf %0, %1 : vector<1x2048xf32>
    %c0_1 = arith.constant 0 : index
    %c0_2 = arith.constant 0 : index
    %3 = vector.load %arg2[%c0_1, %c0_2] : memref<1x2048xf32, #tpu.memory_space<vmem>>, vector<1x2048xf32>
    tpu.vector_store %arg2[%c0_1, %c0_2], %2 {strides = array<i32>} : memref<1x2048xf32, #tpu.memory_space<vmem>>, vector<1x2048xf32>,
    return
  }
  func.func @transform_0(%arg0: i32) -> (i32, i32) {
    %c0_i32 = arith.constant 0 : i32
    %c0_i32_0 = arith.constant 0 : i32
    return %arg0, %c0_i32 : i32, i32
  }
  func.func @transform_1(%arg0: i32) -> (i32, i32) {
    %c0_i32 = arith.constant 0 : i32
    %c0_i32_0 = arith.constant 0 : i32
    return %arg0, %c0_i32 : i32, i32
  }
}

</mosaic_0001>

<llo_original>
// kernel: _act_slab.1
$region0: #{_act_slab.1}
  #allocation0 [shape = 'u32[]', space=smem, size = 0x4, offset = 0x4, fixed_abs, tag = 'smem constant byte address 0x4 - core index']
  #allocation1 [shape = 'u32[144,128]{1,0:T(1,128)}', space=vmem, size = 0x12000, scoped, tag = 'internal scratch']
  %s0 = inlined_call_operand.hbm [shape: f32[1,2048], index: 0, kind: input, shape index: {}]
  %s1 = inlined_call_operand.hbm [shape: f32[1,2048], index: 1, kind: output, shape index: {}]
  %s2 = sld [smem:[#allocation0]]
  $region18: #{_act_slab.1} parent=0
    _
  %s4 = ssub.s32 1, %s2
  %s5 = scalar_select 0, %s4, %s2
  $region1: #{_act_slab.1} parent=0
    #allocation2 [shape = 'u8[8192]{0}', space=vmem, size = 0x2000, scoped, tag = 'input window, operand 0, single buffered']
    #allocation3 [shape = 's32[1]{0}', space=sflag, size = 0x4, scoped, tag = 'scoped memory for _act_slab.1']
    #allocation4 [shape = 's32[1]{0}', space=sflag, size = 0x4, scoped, tag = 'scoped memory for _act_slab.1']
    #allocation5 [shape = 'u8[8192]{0}', space=vmem, size = 0x2000, scoped, tag = 'output window, operand 0, single buffered']
    %6 = vsyncpa [#allocation3], 0
    %7 = vsyncpa [#allocation4], 0
    // Predicated region
    $region2: #{_act_slab.1} parent=1 // pred_check
      _
    $region3: #{_act_slab.1} parent=1 // pred_check_branch
      %9 = sbr.rel (0) target = $region5
    $region4: #{_act_slab.1} parent=1 // pred_region
      %s11 = ssub.s32 256, 256
      %12 = vsyncadd [#allocation3], %s11
      %s14 = sshll.u32 [#allocation2], 4
      %s15 = int_to_ptr.vmem [resolvable:$true] %s14
      %17 = dma.hbm_to_vmem [thread:$0]  %s0, 256, %s15, [#allocation3]
    $region5: #{_act_slab.1} parent=1 // pred_fallthru
      _
    // Predicated region
    $region6: #{_act_slab.1} parent=1 // pred_check
      _
    $region7: #{_act_slab.1} parent=1 // pred_check_branch
      %19 = sbr.rel (0) target = $region9
    $region8: #{_act_slab.1} parent=1 // pred_region
      %20 = dma.done [#allocation3], 256
    $region9: #{_act_slab.1} parent=1 // pred_fallthru
      _
    %v21 = vld [vmem:[#allocation2] sm:$0xff]
    %v22 = vld [vmem:[#allocation2 + $0x8] sm:$0xff]
    %v23 = vmax.f32 %v21, 0.0
    %v24 = vmax.f32 %v22, 0.0
    %25 = vst [vmem:[#allocation5] sm:$0xff] %v23
    %26 = vst [vmem:[#allocation5 + $0x8] sm:$0xff] %v24
    // Predicated region
    $region10: #{_act_slab.1} parent=1 // pred_check
      _
    $region11: #{_act_slab.1} parent=1 // pred_check_branch
      %28 = sbr.rel (0) target = $region13
    $region12: #{_act_slab.1} parent=1 // pred_region
      %s30 = ssub.s32 256, 256
      %31 = vsyncadd [#allocation4], %s30
      %s33 = sshll.u32 [#allocation5], 4
      %s34 = int_to_ptr.vmem [resolvable:$true] %s33
      %36 = dma.vmem_to_hbm [thread:$0]  %s34, 256, %s1, [#allocation4]
    $region13: #{_act_slab.1} parent=1 // pred_fallthru
      _
    // Predicated region
    $region14: #{_act_slab.1} parent=1 // pred_check
      _
    $region15: #{_act_slab.1} parent=1 // pred_check_branch
      %38 = sbr.rel (0) target = $region17
    $region16: #{_act_slab.1} parent=1 // pred_region
      %39 = dma.done [#allocation4], 256
    $region17: #{_act_slab.1} parent=1 // pred_fallthru
      _
    %40 = vsyncpa [#allocation3], 1
    %41 = vsyncpa [#allocation4], 1

</llo_original>
